<compile_context>
chip_gen: v6e
topology: v6e:2x2x1
jax: 0.10.0
libtpu: 0.0.40
codegen_flags: <defaults>
</compile_context>

<pallas_src>
import jax
import jax.numpy as jnp
from jax.experimental import pallas as pl
from jax.experimental.pallas import tpu as pltpu

IN_FEATURES = 2
OUT_FEATURES = 1

LANE = 128            # TPU lane width (last dim of every vreg)
SUBLANE = 8           # TPU sublane count (second-last dim granularity)
MAX_TILE_ROWS = 4096  # rows of 128 lanes per grid step (512K batch elems)
MIN_GRID_STEPS = 2    # keep >= 2 steps so v7x's 2 TensorCores share the grid
SMALL_B = 4096        # below this, plain XLA beats kernel-launch + glue cost


def linear_kernel(params_ref, x_ref, o_ref):
    # params_ref: SMEM f32[3] = [w0, w1, b]
    # x_ref:      VMEM (2, R, 128)  -- feature planes, batch on (rows, lanes)
    # o_ref:      VMEM (R, 128)     -- dense output slab
    w0 = params_ref[0]
    w1 = params_ref[1]
    b = params_ref[2]
    x = x_ref[...]
    o_ref[...] = w0 * x[0] + w1 * x[1] + b


def linear_pallas(x, weight, bias, *, force_pallas=False):
    """y = x @ weight.T + bias (PyTorch nn.Linear(2, 1) forward).

    x:      (B, 2) float32
    weight: (1, 2) float32   (PyTorch Linear layout)
    bias:   (1,)   float32
    returns (B, 1) float32
    """
    B = x.shape[0]
    x = x.astype(jnp.float32)
    weight = weight.astype(jnp.float32)
    bias = bias.astype(jnp.float32)

    # Small-batch fallback: the pad/transpose glue plus kernel launch overhead
    # dominates at this scale; let XLA fuse the 2->1 linear directly.
    if B < SMALL_B and not force_pallas:
        return x @ weight.T + bias

    # ---- tiling -----------------------------------------------------------
    rows_total = pl.cdiv(B, LANE)                      # 128-lane rows needed
    tile_rows = max(1, min(MAX_TILE_ROWS, pl.cdiv(rows_total, MIN_GRID_STEPS)))
    tile_rows = pl.cdiv(tile_rows, SUBLANE) * SUBLANE  # sublane multiple
    rows_padded = pl.cdiv(rows_total, tile_rows) * tile_rows
    b_pad = rows_padded * LANE
    grid = (rows_padded // tile_rows,)

    # ---- glue: one fused pad+transpose+reshape ----------------------------
    # (B, 2) -> (2, B) -> (2, b_pad) -> (2, rows_padded, 128)
    x_t = jnp.pad(x.T, ((0, 0), (0, b_pad - B)))
    x_t = x_t.reshape(IN_FEATURES, rows_padded, LANE)

    # Tiny parameter vector [w0, w1, b] lives whole in SMEM.
    params = jnp.concatenate([weight.reshape(-1), bias.reshape(-1)])

    cost = pl.CostEstimate(
        flops=4 * b_pad,                                   # 2 mul + 2 add / elem
        transcendentals=0,
        bytes_accessed=(IN_FEATURES + OUT_FEATURES) * b_pad * 4,
    )

    out = pl.pallas_call(
        linear_kernel,
        out_shape=jax.ShapeDtypeStruct((rows_padded, LANE), jnp.float32),
        grid_spec=pltpu.PrefetchScalarGridSpec(
            num_scalar_prefetch=0,
            grid=grid,
            in_specs=[
                pl.BlockSpec(memory_space=pltpu.MemorySpace.SMEM),
                pl.BlockSpec((IN_FEATURES, tile_rows, LANE),
                             lambda i: (0, i, 0)),
            ],
            out_specs=pl.BlockSpec((tile_rows, LANE), lambda i: (i, 0)),
        ),
        compiler_params=pltpu.CompilerParams(
            dimension_semantics=("parallel",),
            # ~12 MiB double-buffered at the max tile; 48 MiB keeps headroom
            # on v7x's 64 MiB VMEM and is well within v5e/v6e's 128 MiB.
            vmem_limit_bytes=48 * 1024 * 1024,
        ),
        cost_estimate=cost,
    )(params, x_t)

    # (rows_padded, 128) -> flat prefix slice -> (B, 1)
    return out.reshape(-1)[:B].reshape(B, OUT_FEATURES)


if __name__ == "__main__":
    key = jax.random.PRNGKey(0)
    kx, kw, kb = jax.random.split(key, 3)

    batch = 8
    x = jax.random.normal(kx, (batch, IN_FEATURES), dtype=jnp.float32)

    # Deterministic init mimicking nn.Linear's uniform(-1/sqrt(in), 1/sqrt(in)).
    bound = 1.0 / (IN_FEATURES ** 0.5)
    weight = jax.random.uniform(
        kw, (OUT_FEATURES, IN_FEATURES), jnp.float32, -bound, bound
    )
    bias = jax.random.uniform(kb, (OUT_FEATURES,), jnp.float32, -bound, bound)

    # Force the Pallas path at this small batch so the kernel is exercised.
    y = linear_pallas(x, weight, bias, force_pallas=True)
    jax.block_until_ready(y)
    y_ref = x @ weight.T + bias
    assert y.shape == (batch, OUT_FEATURES)
    assert jnp.allclose(y, y_ref, atol=1e-5, rtol=1e-5)

    # Second (still small) check: ragged batch + multi-step grid.
    batch2 = 2500
    x2 = jax.random.normal(kx, (batch2, IN_FEATURES), dtype=jnp.float32)
    y2 = linear_pallas(x2, weight, bias, force_pallas=True)
    jax.block_until_ready(y2)
    y2_ref = x2 @ weight.T + bias
    assert y2.shape == (batch2, OUT_FEATURES)
    assert jnp.allclose(y2, y2_ref, atol=1e-5, rtol=1e-5)

    # Auto-dispatch (small-B fallback) must match too.
    y3 = linear_pallas(x, weight, bias)
    assert jnp.allclose(y3, y_ref, atol=1e-5, rtol=1e-5)

    print("KERNEL_OK")
</pallas_src>

<mosaic_0001>
module attributes {stable_mosaic.version = 11 : i64} {
  func.func @linear_kernel(%arg0: i32, %arg1: memref<3xf32, #tpu.memory_space<smem>>, %arg2: memref<2x8x128xf32, #tpu.memory_space<vmem>>, %arg3: memref<8x128xf32, #tpu.memory_space<vmem>>) attributes {dimension_semantics = [#tpu.dimension_semantics<parallel>], iteration_bounds = array<i64: 1>, scalar_prefetch = 0 : i64, scratch_operands = 0 : i64, tpu.core_type = #tpu.core_type<tc>, window_params = [{transform_indices = @transform_0, window_bounds = array<i64: 3>}, {transform_indices = @transform_1, window_bounds = array<i64: 2, 8, 128>}, {transform_indices = @transform_2, window_bounds = array<i64: 8, 128>}]} {
    %c0 = arith.constant 0 : index
    %0 = memref.load %arg1[%c0] : memref<3xf32, #tpu.memory_space<smem>>
    %c1 = arith.constant 1 : index
    %1 = memref.load %arg1[%c1] : memref<3xf32, #tpu.memory_space<smem>>
    %c2 = arith.constant 2 : index
    %2 = memref.load %arg1[%c2] : memref<3xf32, #tpu.memory_space<smem>>
    %c0_0 = arith.constant 0 : index
    %c0_1 = arith.constant 0 : index
    %c0_2 = arith.constant 0 : index
    %3 = vector.load %arg2[%c0_0, %c0_1, %c0_2] : memref<2x8x128xf32, #tpu.memory_space<vmem>>, vector<2x8x128xf32>
    %4 = vector.extract_strided_slice %3 {offsets = [0, 0, 0], sizes = [1, 8, 128], strides = [1, 1, 1]} : vector<2x8x128xf32> to vector<1x8x128xf32>
    %5 = vector.shape_cast %4 : vector<1x8x128xf32> to vector<8x128xf32>
    %6 = vector.broadcast %0 : f32 to vector<8x128xf32>
    %7 = arith.mulf %6, %5 : vector<8x128xf32>
    %8 = vector.extract_strided_slice %3 {offsets = [1, 0, 0], sizes = [1, 8, 128], strides = [1, 1, 1]} : vector<2x8x128xf32> to vector<1x8x128xf32>
    %9 = vector.shape_cast %8 : vector<1x8x128xf32> to vector<8x128xf32>
    %10 = vector.broadcast %1 : f32 to vector<8x128xf32>
    %11 = arith.mulf %10, %9 : vector<8x128xf32>
    %12 = arith.addf %7, %11 : vector<8x128xf32>
    %13 = vector.broadcast %2 : f32 to vector<8x128xf32>
    %14 = arith.addf %12, %13 : vector<8x128xf32>
    %c0_3 = arith.constant 0 : index
    %c0_4 = arith.constant 0 : index
    %15 = vector.load %arg3[%c0_3, %c0_4] : memref<8x128xf32, #tpu.memory_space<vmem>>, vector<8x128xf32>
    tpu.vector_store %arg3[%c0_3, %c0_4], %14 {strides = array<i32>} : memref<8x128xf32, #tpu.memory_space<vmem>>, vector<8x128xf32>,
    return
  }
  func.func @transform_0(%arg0: i32) -> i32 {
    %c0_i32 = arith.constant 0 : i32
    %c0_i32_0 = arith.constant 0 : i32
    return %c0_i32 : i32
  }
  func.func @transform_1(%arg0: i32) -> (i32, i32, i32) {
    %c0_i32 = arith.constant 0 : i32
    %c0_i32_0 = arith.constant 0 : i32
    %c0_i32_1 = arith.constant 0 : i32
    return %c0_i32, %arg0, %c0_i32_0 : i32, i32, i32
  }
  func.func @transform_2(%arg0: i32) -> (i32, i32) {
    %c0_i32 = arith.constant 0 : i32
    %c0_i32_0 = arith.constant 0 : i32
    return %arg0, %c0_i32 : i32, i32
  }
}

</mosaic_0001>

<llo_original>
// kernel: tpu_custom_call.1
$region0: #{tpu_custom_call.1}
  #allocation0 [shape = 'u32[]', space=smem, size = 0x4, offset = 0x4, fixed_abs, tag = 'smem constant byte address 0x4 - core index']
  #allocation1 [shape = 'u32[144,128]{1,0:T(1,128)}', space=vmem, size = 0x12000, scoped, tag = 'internal scratch']
  %s0 = inlined_call_operand.hbm [shape: f32[3], index: 0, kind: input, shape index: {}]
  %s1 = inlined_call_operand.hbm [shape: f32[2,8,128], index: 1, kind: input, shape index: {}]
  %s2 = inlined_call_operand.hbm [shape: f32[8,128], index: 2, kind: output, shape index: {}]
  %s3 = sld [smem:[#allocation0]]
  $region26: #{tpu_custom_call.1} parent=0
    _
  %s5 = ssub.s32 1, %s3
  %s6 = scalar_select 0, %s5, %s3
  $region1: #{tpu_custom_call.1} parent=0
    #allocation2 [shape = 'u8[512]{0}', space=smem, size = 0x200, scoped, tag = 'input window, operand 0, single buffered']
    #allocation3 [shape = 's32[1]{0}', space=sflag, size = 0x4, scoped, tag = 'scoped memory for tpu_custom_call.1']
    #allocation4 [shape = 's32[1]{0}', space=sflag, size = 0x4, scoped, tag = 'scoped memory for tpu_custom_call.1']
    #allocation5 [shape = 's32[1]{0}', space=sflag, size = 0x4, scoped, tag = 'scoped memory for tpu_custom_call.1']
    #allocation6 [shape = 'u8[8192]{0}', space=vmem, size = 0x2000, scoped, tag = 'input window, operand 1, single buffered']
    #allocation7 [shape = 'u8[4096]{0}', space=vmem, size = 0x1000, scoped, tag = 'output window, operand 0, single buffered']
    %7 = vsyncpa [#allocation5], 0
    %8 = vsyncpa [#allocation3], 0
    %9 = vsyncpa [#allocation4], 0
    // Predicated region
    $region2: #{tpu_custom_call.1} parent=1 // pred_check
      _
    $region3: #{tpu_custom_call.1} parent=1 // pred_check_branch
      %11 = sbr.rel (0) target = $region5
    $region4: #{tpu_custom_call.1} parent=1 // pred_region
      %s13 = ssub.s32 16, 16
      %14 = vsyncadd [#allocation5], %s13
      %17 = dma.hbm_to_smem %s0, 16, [#allocation2], [#allocation5]
    $region5: #{tpu_custom_call.1} parent=1 // pred_fallthru
      _
    // Predicated region
    $region6: #{tpu_custom_call.1} parent=1 // pred_check
      _
    $region7: #{tpu_custom_call.1} parent=1 // pred_check_branch
      %19 = sbr.rel (0) target = $region9
    $region8: #{tpu_custom_call.1} parent=1 // pred_region
      %s21 = ssub.s32 256, 256
      %22 = vsyncadd [#allocation3], %s21
      %s23 = sshll.u32 [#allocation6], 4
      %s24 = int_to_ptr.vmem [resolvable:$true] %s23
      %29 = dma.hbm_to_vmem [thread:$0]  %s1, 256, %s24, [#allocation3], 128, 128, 8
    $region9: #{tpu_custom_call.1} parent=1 // pred_fallthru
      _
    // Predicated region
    $region10: #{tpu_custom_call.1} parent=1 // pred_check
      _
    $region11: #{tpu_custom_call.1} parent=1 // pred_check_branch
      %31 = sbr.rel (0) target = $region13
    $region12: #{tpu_custom_call.1} parent=1 // pred_region
      %32 = dma.done [#allocation5], 16
    $region13: #{tpu_custom_call.1} parent=1 // pred_fallthru
      _
    // Predicated region
    $region14: #{tpu_custom_call.1} parent=1 // pred_check
      _
    $region15: #{tpu_custom_call.1} parent=1 // pred_check_branch
      %34 = sbr.rel (0) target = $region17
    $region16: #{tpu_custom_call.1} parent=1 // pred_region
      %35 = dma.done [#allocation3], 256
    $region17: #{tpu_custom_call.1} parent=1 // pred_fallthru
      _
    %36 = sfence
    %s37 = sld [smem:[#allocation2]]
    %s38 = sld [smem:[#allocation2 + $0x1]]
    %s39 = sld [smem:[#allocation2 + $0x2]]
    %v40 = vld [vmem:[#allocation6] sm:$0xff]
    %v41 = vld [vmem:[#allocation6 + $0x8] sm:$0xff]
    %v42 = vstv %s37
    %v43 = vmul.f32 %v42, %v40
    %v44 = vstv %s38
    %v45 = vmul.f32 %v44, %v41
    %v46 = vadd.f32 %v43, %v45
    %v47 = vstv %s39
    %v48 = vadd.f32 %v46, %v47
    %49 = vst [vmem:[#allocation7] sm:$0xff] %v48
    // Predicated region
    $region18: #{tpu_custom_call.1} parent=1 // pred_check
      _
    $region19: #{tpu_custom_call.1} parent=1 // pred_check_branch
      %51 = sbr.rel (0) target = $region21
    $region20: #{tpu_custom_call.1} parent=1 // pred_region
      %s53 = ssub.s32 128, 128
      %54 = vsyncadd [#allocation4], %s53
      %s56 = sshll.u32 [#allocation7], 4
      %s57 = int_to_ptr.vmem [resolvable:$true] %s56
      %59 = dma.vmem_to_hbm [thread:$0]  %s57, 128, %s2, [#allocation4]
    $region21: #{tpu_custom_call.1} parent=1 // pred_fallthru
      _
    // Predicated region
    $region22: #{tpu_custom_call.1} parent=1 // pred_check
      _
    $region23: #{tpu_custom_call.1} parent=1 // pred_check_branch
      %61 = sbr.rel (0) target = $region25
    $region24: #{tpu_custom_call.1} parent=1 // pred_region
      %62 = dma.done [#allocation4], 128
    $region25: #{tpu_custom_call.1} parent=1 // pred_fallthru
      _
    %63 = vsyncpa [#allocation3], 1
    %64 = vsyncpa [#allocation4], 1
    %65 = vsyncpa [#allocation5], 1

</llo_original>
